<compile_context>
chip_gen: v5e
topology: v5e:2x2
jax: 0.10.0
libtpu: 0.0.40
codegen_flags: <defaults>
</compile_context>

<pallas_src>
import functools

import jax
import jax.numpy as jnp
from jax.experimental import pallas as pl
from jax.experimental.pallas import tpu as pltpu

_EPS = 1e-5
_LANE = 128


def _round_up(x, m):
    return (x + m - 1) // m * m


# ----------------------------------------------------------------------------- kernels
def _linear_stats_kernel(x_ref, w_ref, h_ref, s_ref, ss_ref):
    """h = x @ W (bf16 -> f32); also emit per-tile sum / sumsq partials for BN."""
    h = jnp.dot(x_ref[...], w_ref[...], preferred_element_type=jnp.float32)
    h_ref[...] = h.astype(h_ref.dtype)
    # Padded batch rows of x are zero and there is no bias, so they contribute 0.
    s_ref[...] = jnp.broadcast_to(jnp.sum(h, axis=0, keepdims=True), s_ref.shape)
    ss_ref[...] = jnp.broadcast_to(jnp.sum(h * h, axis=0, keepdims=True), ss_ref.shape)


def _bn_relu_linear_stats_kernel(h_ref, mean_ref, rstd_ref, g_ref, be_ref, w_ref,
                                 o_ref, s_ref, ss_ref, *, true_rows, tile_rows):
    """a = relu(BN(h)); h2 = a @ W; emit per-tile sum/sumsq partials of h2."""
    h = h_ref[...].astype(jnp.float32)
    a = jnp.maximum((h - mean_ref[...]) * rstd_ref[...] * g_ref[...] + be_ref[...], 0.0)
    # Zero rows beyond the true batch so they cannot pollute the next layer's stats.
    row = (jax.lax.broadcasted_iota(jnp.int32, a.shape, 0)
           + pl.program_id(0) * tile_rows)
    a = jnp.where(row < true_rows, a, 0.0)
    h2 = jnp.dot(a.astype(jnp.bfloat16), w_ref[...], preferred_element_type=jnp.float32)
    o_ref[...] = h2.astype(o_ref.dtype)
    s_ref[...] = jnp.broadcast_to(jnp.sum(h2, axis=0, keepdims=True), s_ref.shape)
    ss_ref[...] = jnp.broadcast_to(jnp.sum(h2 * h2, axis=0, keepdims=True), ss_ref.shape)


def _bn_relu_linear_bias_kernel(h_ref, mean_ref, rstd_ref, g_ref, be_ref,
                                w_ref, b_ref, o_ref):
    """out = relu(BN(h)) @ W + b  (lane-dense padded output slab)."""
    h = h_ref[...].astype(jnp.float32)
    a = jnp.maximum((h - mean_ref[...]) * rstd_ref[...] * g_ref[...] + be_ref[...], 0.0)
    o_ref[...] = (jnp.dot(a.astype(jnp.bfloat16), w_ref[...],
                          preferred_element_type=jnp.float32) + b_ref[...])


# ----------------------------------------------------------------------------- wrapper
def prepare_params(params):
    """Pad parameters to 128-lane widths once; matmul weights stored as bf16."""
    d_in, hidden = params["w1"].shape
    out_dim = params["w3"].shape[1]
    dp, hp, op = _round_up(d_in, _LANE), _round_up(hidden, _LANE), _round_up(out_dim, _LANE)

    def pad2(a, r, c):
        return jnp.pad(a, ((0, r - a.shape[0]), (0, c - a.shape[1])))

    return {
        # b1 / b2 dropped: BatchNorm's mean subtraction cancels them exactly.
        "w1": pad2(params["w1"], dp, hp).astype(jnp.bfloat16),
        "w2": pad2(params["w2"], hp, hp).astype(jnp.bfloat16),
        "w3": pad2(params["w3"], hp, op).astype(jnp.bfloat16),
        "b3": pad2(params["b3"], 1, op).astype(jnp.float32),
        "g1": pad2(params["g1"], 1, hp).astype(jnp.float32),
        "be1": pad2(params["be1"], 1, hp).astype(jnp.float32),
        "g2": pad2(params["g2"], 1, hp).astype(jnp.float32),
        "be2": pad2(params["be2"], 1, hp).astype(jnp.float32),
        "dims": (d_in, hidden, out_dim),
    }


def relation_dnn_forward(x, prep, *, tile_b=512):
    """x: [B, input_dim] float32 -> [B, output_dim] float32."""
    d_in, hidden, out_dim = prep["dims"]
    B = x.shape[0]
    dp, hp = prep["w1"].shape
    op = prep["w3"].shape[1]

    tile_b = min(tile_b, _round_up(B, 16))      # 16 = bf16 sublane packing
    bp = _round_up(B, tile_b)
    nb = bp // tile_b

    x_pad = jnp.pad(x, ((0, bp - B), (0, dp - d_in))).astype(jnp.bfloat16)

    par = pltpu.CompilerParams(dimension_semantics=("parallel",))

    def finalize_stats(s, ss):
        tot = s.reshape(nb, 8, hp)[:, 0, :].sum(axis=0)
        tot2 = ss.reshape(nb, 8, hp)[:, 0, :].sum(axis=0)
        mean = tot / B                                   # true batch size, not padded
        var = jnp.maximum(tot2 / B - mean * mean, 0.0)   # biased var (PyTorch BN fwd)
        rstd = jax.lax.rsqrt(var + _EPS)
        return mean.reshape(1, hp), rstd.reshape(1, hp)

    stat_shape = jax.ShapeDtypeStruct((nb * 8, hp), jnp.float32)
    stat_spec = pl.BlockSpec((8, hp), lambda i: (i, 0))
    row_spec_h = pl.BlockSpec((tile_b, hp), lambda i: (i, 0))
    vec_spec = pl.BlockSpec((1, hp), lambda i: (0, 0))

    # ---- stage 1: Linear1 (+ partial BN1 stats) -----------------------------------
    h1, s1, ss1 = pl.pallas_call(
        _linear_stats_kernel,
        out_shape=(jax.ShapeDtypeStruct((bp, hp), jnp.bfloat16), stat_shape, stat_shape),
        grid=(nb,),
        in_specs=[pl.BlockSpec((tile_b, dp), lambda i: (i, 0)),
                  pl.BlockSpec((dp, hp), lambda i: (0, 0))],
        out_specs=(row_spec_h, stat_spec, stat_spec),
        compiler_params=par,
        cost_estimate=pl.CostEstimate(
            flops=2 * bp * dp * hp, transcendentals=0,
            bytes_accessed=2 * (bp * dp + dp * hp + bp * hp)),
    )(x_pad, prep["w1"])
    mean1, rstd1 = finalize_stats(s1, ss1)

    # ---- stage 2: BN1 + ReLU + Linear2 (+ partial BN2 stats) ----------------------
    h2, s2, ss2 = pl.pallas_call(
        functools.partial(_bn_relu_linear_stats_kernel,
                          true_rows=B, tile_rows=tile_b),
        out_shape=(jax.ShapeDtypeStruct((bp, hp), jnp.bfloat16), stat_shape, stat_shape),
        grid=(nb,),
        in_specs=[row_spec_h, vec_spec, vec_spec, vec_spec, vec_spec,
                  pl.BlockSpec((hp, hp), lambda i: (0, 0))],
        out_specs=(row_spec_h, stat_spec, stat_spec),
        compiler_params=par,
        cost_estimate=pl.CostEstimate(
            flops=2 * bp * hp * hp + 8 * bp * hp, transcendentals=0,
            bytes_accessed=2 * (2 * bp * hp + hp * hp)),
    )(h1, mean1, rstd1, prep["g1"], prep["be1"], prep["w2"])
    mean2, rstd2 = finalize_stats(s2, ss2)

    # ---- stage 3: BN2 + ReLU + Linear3 + bias --------------------------------------
    out_pad = pl.pallas_call(
        _bn_relu_linear_bias_kernel,
        out_shape=jax.ShapeDtypeStruct((bp, op), jnp.float32),
        grid=(nb,),
        in_specs=[row_spec_h, vec_spec, vec_spec, vec_spec, vec_spec,
                  pl.BlockSpec((hp, op), lambda i: (0, 0)),
                  pl.BlockSpec((1, op), lambda i: (0, 0))],
        out_specs=pl.BlockSpec((tile_b, op), lambda i: (i, 0)),
        compiler_params=par,
        cost_estimate=pl.CostEstimate(
            flops=2 * bp * hp * op + 8 * bp * hp, transcendentals=0,
            bytes_accessed=2 * bp * hp + 2 * hp * op + 4 * bp * op),
    )(h2, mean2, rstd2, prep["g2"], prep["be2"], prep["w3"], prep["b3"])

    return out_pad[:B, :out_dim]


# ----------------------------------------------------------------------------- params / ref
def init_params(key, input_dim, hidden_dim, output_dim):
    """PyTorch-default-style init (uniform +-1/sqrt(fan_in); BN gamma=1, beta=0)."""
    ks = jax.random.split(key, 6)

    def linear(kw, kb, fan_in, fan_out):
        bound = 1.0 / jnp.sqrt(jnp.float32(fan_in))
        w = jax.random.uniform(kw, (fan_in, fan_out), jnp.float32, -bound, bound)
        b = jax.random.uniform(kb, (1, fan_out), jnp.float32, -bound, bound)
        return w, b

    w1, b1 = linear(ks[0], ks[1], input_dim, hidden_dim)
    w2, b2 = linear(ks[2], ks[3], hidden_dim, hidden_dim)
    w3, b3 = linear(ks[4], ks[5], hidden_dim, output_dim)
    return {
        "w1": w1, "b1": b1,
        "g1": jnp.ones((1, hidden_dim), jnp.float32),
        "be1": jnp.zeros((1, hidden_dim), jnp.float32),
        "w2": w2, "b2": b2,
        "g2": jnp.ones((1, hidden_dim), jnp.float32),
        "be2": jnp.zeros((1, hidden_dim), jnp.float32),
        "w3": w3, "b3": b3,
    }


def _reference_forward(x, p):
    """Plain-JAX f32 reference (training-mode BN, with the original biases)."""
    h = x @ p["w1"] + p["b1"]
    m = h.mean(0, keepdims=True); v = ((h - m) ** 2).mean(0, keepdims=True)
    h = jnp.maximum((h - m) / jnp.sqrt(v + _EPS) * p["g1"] + p["be1"], 0.0)
    h = h @ p["w2"] + p["b2"]
    m = h.mean(0, keepdims=True); v = ((h - m) ** 2).mean(0, keepdims=True)
    h = jnp.maximum((h - m) / jnp.sqrt(v + _EPS) * p["g2"] + p["be2"], 0.0)
    return h @ p["w3"] + p["b3"]


if __name__ == "__main__":
    key = jax.random.PRNGKey(0)
    k_x, k_p = jax.random.split(key)

    B, INPUT_DIM, HIDDEN_DIM, OUTPUT_DIM = 8, 16, 32, 8
    x = jax.random.normal(k_x, (B, INPUT_DIM), jnp.float32)
    params = init_params(k_p, INPUT_DIM, HIDDEN_DIM, OUTPUT_DIM)
    prep = prepare_params(params)

    out = relation_dnn_forward(x, prep)
    out = jax.block_until_ready(out)

    ref = _reference_forward(x, params)
    assert out.shape == (B, OUTPUT_DIM)
    # bf16 matmul operands -> allow small numerical slack vs the f32 reference.
    assert jnp.allclose(out, ref, atol=8e-2, rtol=5e-2), (
        f"mismatch vs reference, max abs diff = {float(jnp.max(jnp.abs(out - ref)))}")

    print("KERNEL_OK")
</pallas_src>

<mosaic_0001>
module attributes {stable_mosaic.version = 11 : i64} {
  func.func @_linear_stats_kernel(%arg0: i32, %arg1: memref<16x128xbf16, #tpu.memory_space<vmem>>, %arg2: memref<128x128xbf16, #tpu.memory_space<vmem>>, %arg3: memref<16x128xbf16, #tpu.memory_space<vmem>>, %arg4: memref<8x128xf32, #tpu.memory_space<vmem>>, %arg5: memref<8x128xf32, #tpu.memory_space<vmem>>) attributes {dimension_semantics = [#tpu.dimension_semantics<parallel>], iteration_bounds = array<i64: 1>, scalar_prefetch = 0 : i64, scratch_operands = 0 : i64, tpu.core_type = #tpu.core_type<tc>, window_params = [{transform_indices = @transform_0, window_bounds = array<i64: 16, 128>}, {pipeline_mode = #tpu.pipeline_mode<synchronous>, transform_indices = @transform_1, window_bounds = array<i64: 128, 128>}, {transform_indices = @transform_2, window_bounds = array<i64: 16, 128>}, {transform_indices = @transform_3, window_bounds = array<i64: 8, 128>}, {transform_indices = @transform_4, window_bounds = array<i64: 8, 128>}]} {
    %c0 = arith.constant 0 : index
    %c0_0 = arith.constant 0 : index
    %0 = vector.load %arg1[%c0, %c0_0] : memref<16x128xbf16, #tpu.memory_space<vmem>>, vector<16x128xbf16>
    %c0_1 = arith.constant 0 : index
    %c0_2 = arith.constant 0 : index
    %1 = vector.load %arg2[%c0_1, %c0_2] : memref<128x128xbf16, #tpu.memory_space<vmem>>, vector<128x128xbf16>
    %cst = arith.constant dense<0.000000e+00> : vector<16x128xf32>
    %2 = tpu.matmul %0, %1, %cst {dimension_numbers = #tpu.dot_dimension_numbers<[1], [0], [0], [1], [0, 0, 1, 1], [], []>} : vector<16x128xbf16>, vector<128x128xbf16>, vector<16x128xf32> -> vector<16x128xf32>
    %3 = arith.truncf %2 : vector<16x128xf32> to vector<16x128xbf16>
    %c0_3 = arith.constant 0 : index
    %c0_4 = arith.constant 0 : index
    %4 = vector.load %arg3[%c0_3, %c0_4] : memref<16x128xbf16, #tpu.memory_space<vmem>>, vector<16x128xbf16>
    tpu.vector_store %arg3[%c0_3, %c0_4], %3 {strides = array<i32>} : memref<16x128xbf16, #tpu.memory_space<vmem>>, vector<16x128xbf16>,
    %cst_5 = arith.constant dense<0.000000e+00> : vector<128xf32>
    %5 = vector.multi_reduction <add>, %2, %cst_5 [0] : vector<16x128xf32> to vector<128xf32>
    %6 = vector.shape_cast %5 : vector<128xf32> to vector<1x128xf32>
    %7 = vector.shape_cast %6 : vector<1x128xf32> to vector<1x128xf32>
    %8 = vector.broadcast %7 : vector<1x128xf32> to vector<8x128xf32>
    %c0_6 = arith.constant 0 : index
    %c0_7 = arith.constant 0 : index
    %9 = vector.load %arg4[%c0_6, %c0_7] : memref<8x128xf32, #tpu.memory_space<vmem>>, vector<8x128xf32>
    tpu.vector_store %arg4[%c0_6, %c0_7], %8 {strides = array<i32>} : memref<8x128xf32, #tpu.memory_space<vmem>>, vector<8x128xf32>,
    %10 = arith.mulf %2, %2 : vector<16x128xf32>
    %cst_8 = arith.constant dense<0.000000e+00> : vector<128xf32>
    %11 = vector.multi_reduction <add>, %10, %cst_8 [0] : vector<16x128xf32> to vector<128xf32>
    %12 = vector.shape_cast %11 : vector<128xf32> to vector<1x128xf32>
    %13 = vector.shape_cast %12 : vector<1x128xf32> to vector<1x128xf32>
    %14 = vector.broadcast %13 : vector<1x128xf32> to vector<8x128xf32>
    %c0_9 = arith.constant 0 : index
    %c0_10 = arith.constant 0 : index
    %15 = vector.load %arg5[%c0_9, %c0_10] : memref<8x128xf32, #tpu.memory_space<vmem>>, vector<8x128xf32>
    tpu.vector_store %arg5[%c0_9, %c0_10], %14 {strides = array<i32>} : memref<8x128xf32, #tpu.memory_space<vmem>>, vector<8x128xf32>,
    return
  }
  func.func @transform_0(%arg0: i32) -> (i32, i32) {
    %c0_i32 = arith.constant 0 : i32
    %c0_i32_0 = arith.constant 0 : i32
    return %arg0, %c0_i32 : i32, i32
  }
  func.func @transform_1(%arg0: i32) -> (i32, i32) {
    %c0_i32 = arith.constant 0 : i32
    %c0_i32_0 = arith.constant 0 : i32
    %c0_i32_1 = arith.constant 0 : i32
    return %c0_i32, %c0_i32_0 : i32, i32
  }
  func.func @transform_2(%arg0: i32) -> (i32, i32) {
    %c0_i32 = arith.constant 0 : i32
    %c0_i32_0 = arith.constant 0 : i32
    return %arg0, %c0_i32 : i32, i32
  }
  func.func @transform_3(%arg0: i32) -> (i32, i32) {
    %c0_i32 = arith.constant 0 : i32
    %c0_i32_0 = arith.constant 0 : i32
    return %arg0, %c0_i32 : i32, i32
  }
  func.func @transform_4(%arg0: i32) -> (i32, i32) {
    %c0_i32 = arith.constant 0 : i32
    %c0_i32_0 = arith.constant 0 : i32
    return %arg0, %c0_i32 : i32, i32
  }
}

</mosaic_0001>

<llo_original>
// kernel: tpu_custom_call.1
$region0: #{tpu_custom_call.1}
  #allocation0 [shape = 'u32[]', space=smem, size = 0x4, offset = 0x4, fixed_abs, tag = 'smem constant byte address 0x4 - core index']
  #allocation1 [shape = 'u32[72,128]{1,0:T(1,128)}', space=vmem, size = 0x9000, scoped, tag = 'internal scratch']
  %s0 = inlined_call_operand.hbm [shape: bf16[16,128], index: 0, kind: input, shape index: {}]
  %s1 = inlined_call_operand.hbm [shape: bf16[128,128], index: 1, kind: input, shape index: {}]
  %s2 = inlined_call_operand.hbm [shape: bf16[16,128], index: 2, kind: output, shape index: {0}]
  %s3 = inlined_call_operand.hbm [shape: f32[8,128], index: 3, kind: output, shape index: {1}]
  %s4 = inlined_call_operand.hbm [shape: f32[8,128], index: 4, kind: output, shape index: {2}]
  %5 = xla_tuple %s2, %s3, %s4
  %s6 = sld [smem:[#allocation0]]
  $region42: #{tpu_custom_call.1} parent=0
    _
  %s8 = ssub.s32 1, %s6
  %s9 = scalar_select 0, %s8, %s6
  $region1: #{tpu_custom_call.1} parent=0
    #allocation2 [shape = 'u8[4096]{0}', space=vmem, size = 0x1000, scoped, tag = 'input window, operand 0, single buffered']
    #allocation3 [shape = 's32[1]{0}', space=sflag, size = 0x4, scoped, tag = 'scoped memory for tpu_custom_call.1']
    #allocation4 [shape = 's32[1]{0}', space=sflag, size = 0x4, scoped, tag = 'scoped memory for tpu_custom_call.1']
    #allocation5 [shape = 'u8[32768]{0}', space=vmem, size = 0x8000, scoped, tag = 'input window, operand 1, single buffered']
    #allocation6 [shape = 's32[1]{0}', space=sflag, size = 0x4, scoped, tag = 'scoped memory for tpu_custom_call.1']
    #allocation7 [shape = 'u8[4096]{0}', space=vmem, size = 0x1000, scoped, tag = 'output window, operand 0, single buffered']
    #allocation8 [shape = 'u8[4096]{0}', space=vmem, size = 0x1000, scoped, tag = 'output window, operand 1, single buffered']
    #allocation9 [shape = 's32[1]{0}', space=sflag, size = 0x4, scoped, tag = 'scoped memory for tpu_custom_call.1']
    #allocation10 [shape = 'u8[4096]{0}', space=vmem, size = 0x1000, scoped, tag = 'output window, operand 2, single buffered']
    %10 = vsyncpa [#allocation3], 0
    %11 = vsyncpa [#allocation6], 0
    %12 = vsyncpa [#allocation4], 0
    %13 = vsyncpa [#allocation9], 0
    // Predicated region
    $region2: #{tpu_custom_call.1} parent=1 // pred_check
      _
    $region3: #{tpu_custom_call.1} parent=1 // pred_check_branch
      %15 = sbr.rel (0) target = $region5
    $region4: #{tpu_custom_call.1} parent=1 // pred_region
      %17 = vsyncadd [#allocation3], 0
      %s18 = sshll.u32 %s0, 4
      %s19 = int_to_ptr.hbm [resolvable:$true] %s18
      %s20 = sshll.u32 [#allocation2], 4
      %s21 = int_to_ptr.vmem [resolvable:$true] %s20
      %26 = dma.hbm_to_vmem [thread:$0]  %s19, 128, %s21, [#allocation3], 64, 64, 4
    $region5: #{tpu_custom_call.1} parent=1 // pred_fallthru
      _
    // Predicated region
    $region6: #{tpu_custom_call.1} parent=1 // pred_check
      _
    $region7: #{tpu_custom_call.1} parent=1 // pred_check_branch
      %28 = sbr.rel (0) target = $region9
    $region8: #{tpu_custom_call.1} parent=1 // pred_region
      %30 = vsyncadd [#allocation6], 0
      %s31 = sshll.u32 %s1, 4
      %s32 = int_to_ptr.hbm [resolvable:$true] %s31
      %s33 = sshll.u32 [#allocation5], 4
      %s34 = int_to_ptr.vmem [resolvable:$true] %s33
      %39 = dma.hbm_to_vmem [thread:$0]  %s32, 1024, %s34, [#allocation6], 64, 64, 4
    $region9: #{tpu_custom_call.1} parent=1 // pred_fallthru
      _
    // Predicated region
    $region10: #{tpu_custom_call.1} parent=1 // pred_check
      _
    $region11: #{tpu_custom_call.1} parent=1 // pred_check_branch
      %41 = sbr.rel (0) target = $region13
    $region12: #{tpu_custom_call.1} parent=1 // pred_region
      %43 = dma.done [#allocation3], 128
    $region13: #{tpu_custom_call.1} parent=1 // pred_fallthru
      _
    // Predicated region
    $region14: #{tpu_custom_call.1} parent=1 // pred_check
      _
    $region15: #{tpu_custom_call.1} parent=1 // pred_check_branch
      %45 = sbr.rel (0) target = $region17
    $region16: #{tpu_custom_call.1} parent=1 // pred_region
      %47 = dma.done [#allocation6], 1024
    $region17: #{tpu_custom_call.1} parent=1 // pred_fallthru
      _
    %v48 = vld [vmem:[#allocation2] sm:$0xf]
    %v49 = vld [vmem:[#allocation2 + $0x4] sm:$0xf]
    %v50 = vld [vmem:[#allocation5] sm:$0xf]
    %v51 = vld [vmem:[#allocation5 + $0x4] sm:$0xf]
    %v52 = vld [vmem:[#allocation5 + $0x8] sm:$0xf]
    %v53 = vld [vmem:[#allocation5 + $0xc] sm:$0xf]
    %v54 = vld [vmem:[#allocation5 + $0x10] sm:$0xf]
    %v55 = vld [vmem:[#allocation5 + $0x14] sm:$0xf]
    %v56 = vld [vmem:[#allocation5 + $0x18] sm:$0xf]
    %v57 = vld [vmem:[#allocation5 + $0x1c] sm:$0xf]
    %v58 = vld [vmem:[#allocation5 + $0x20] sm:$0xf]
    %v59 = vld [vmem:[#allocation5 + $0x24] sm:$0xf]
    %v60 = vld [vmem:[#allocation5 + $0x28] sm:$0xf]
    %v61 = vld [vmem:[#allocation5 + $0x2c] sm:$0xf]
    %v62 = vld [vmem:[#allocation5 + $0x30] sm:$0xf]
    %v63 = vld [vmem:[#allocation5 + $0x34] sm:$0xf]
    %v64 = vld [vmem:[#allocation5 + $0x38] sm:$0xf]
    %v65 = vld [vmem:[#allocation5 + $0x3c] sm:$0xf]
    %v68 = vunpack.c.l.b16 %v48
    %v69 = vunpack.c.l.b16 %v49
    %v70 = vpack.c.b16 %v69, %v68
    %v88 = vunpack.c.l.b16 %v50
    %v89 = vunpack.c.l.b16 %v51
    %v90 = vunpack.c.l.b16 %v52
    %v91 = vunpack.c.l.b16 %v53
    %v92 = vunpack.c.l.b16 %v54
    %v93 = vunpack.c.l.b16 %v55
    %v94 = vunpack.c.l.b16 %v56
    %v95 = vunpack.c.l.b16 %v57
    %v96 = vunpack.c.l.b16 %v58
    %v97 = vunpack.c.l.b16 %v59
    %v98 = vunpack.c.l.b16 %v60
    %v99 = vunpack.c.l.b16 %v61
    %v100 = vunpack.c.l.b16 %v62
    %v101 = vunpack.c.l.b16 %v63
    %v102 = vunpack.c.l.b16 %v64
    %v103 = vunpack.c.l.b16 %v65
    %v104 = vpack.c.b16 %v89, %v88
    %v105 = vpack.c.b16 %v91, %v90
    %v106 = vpack.c.b16 %v93, %v92
    %v107 = vpack.c.b16 %v95, %v94
    %v108 = vpack.c.b16 %v97, %v96
    %v109 = vpack.c.b16 %v99, %v98
    %v110 = vpack.c.b16 %v101, %v100
    %v111 = vpack.c.b16 %v103, %v102
    %120 = vmatpush.bf16.msra.mxu0 %v111
    %121 = vmatpush.bf16.msra.mxu0 %v110
    %122 = vmatpush.bf16.msra.mxu0 %v109
    %123 = vmatpush.bf16.msra.mxu0 %v108
    %124 = vmatpush.bf16.msra.mxu0 %v107
    %125 = vmatpush.bf16.msra.mxu0 %v106
    %126 = vmatpush.bf16.msra.mxu0 %v105
    %127 = vmatpush.bf16.msra.mxu0 %v104
    %128 = vmatmul.bf16.gmra.mxu0 %v70
    %v129 = vpop.f32.mrf.mxu0
    %v130 = vadd.f32 0.0, %v129
    %v131 = vpop.f32.mrf.mxu0
    %v132 = vadd.f32 0.0, %v131
    %133 = vdwg.mxu0
    %v134 = vpack.c.bf16 %v130, %v130
    %v135 = vpack.c.bf16 %v132, %v132
    %136 = vst [vmem:[#allocation7] sm:$0xf] %v134
    %137 = vst [vmem:[#allocation7 + $0x4] sm:$0xf] %v135
    %v138 = vadd.f32 %v130, %v132
    %v139 = vrot.slane %v138, 4
    %v140 = vadd.f32 %v138, %v139
    %v141 = vrot.slane %v140, 2
    %v142 = vadd.f32 %v140, %v141
    %v143 = vrot.slane %v142, 1
    %v144 = vadd.f32 %v142, %v143
    %145 = vst [vmem:[#allocation8] sm:$0xff] %v144
    %v146 = vmul.f32 %v130, %v130
    %v147 = vmul.f32 %v132, %v132
    %v148 = vadd.f32 %v146, %v147
    %v149 = vrot.slane %v148, 4
    %v150 = vadd.f32 %v148, %v149
    %v151 = vrot.slane %v150, 2
    %v152 = vadd.f32 %v150, %v151
    %v153 = vrot.slane %v152, 1
    %v154 = vadd.f32 %v152, %v153
    %155 = vst [vmem:[#allocation10] sm:$0xff] %v154
    // Predicated region
    $region18: #{tpu_custom_call.1} parent=1 // pred_check
      _
    $region19: #{tpu_custom_call.1} parent=1 // pred_check_branch
      %157 = sbr.rel (0) target = $region21
    $region20: #{tpu_custom_call.1} parent=1 // pred_region
      %159 = vsyncadd [#allocation4], 0
      %s160 = sshll.u32 [#allocation7], 4
      %s161 = int_to_ptr.vmem [resolvable:$true] %s160
      %s162 = sshll.u32 %s2, 4
      %s163 = int_to_ptr.hbm [resolvable:$true] %s162
      %168 = dma.vmem_to_hbm [thread:$0]  %s161, 128, %s163, [#allocation4], 64, 64, 4
    $region21: #{tpu_custom_call.1} parent=1 // pred_fallthru
      _
    // Predicated region
    $region22: #{tpu_custom_call.1} parent=1 // pred_check
      _
    $region23: #{tpu_custom_call.1} parent=1 // pred_check_branch
      %170 = sbr.rel (0) target = $region25
    $region24: #{tpu_custom_call.1} parent=1 // pred_region
      %172 = vsyncadd [#allocation9], 0
      %s174 = sshll.u32 [#allocation8], 4
      %s175 = int_to_ptr.vmem [resolvable:$true] %s174
      %s176 = sshll.u32 %s3, 4
      %s177 = int_to_ptr.hbm [resolvable:$true] %s176
      %179 = dma.vmem_to_hbm [thread:$0]  %s175, 128, %s177, [#allocation9]
    $region25: #{tpu_custom_call.1} parent=1 // pred_fallthru
      _
    // Predicated region
    $region26: #{tpu_custom_call.1} parent=1 // pred_check
      _
    $region27: #{tpu_custom_call.1} parent=1 // pred_check_branch
      %181 = sbr.rel (0) target = $region29
    $region28: #{tpu_custom_call.1} parent=1 // pred_region
      %183 = vsyncadd [#allocation9], 0
      %s185 = sshll.u32 [#allocation10], 4
      %s186 = int_to_ptr.vmem [resolvable:$true] %s185
      %s187 = sshll.u32 %s4, 4
      %s188 = int_to_ptr.hbm [resolvable:$true] %s187
      %190 = dma.vmem_to_hbm [thread:$0]  %s186, 128, %s188, [#allocation9]
    $region29: #{tpu_custom_call.1} parent=1 // pred_fallthru
      _
    // Predicated region
    $region30: #{tpu_custom_call.1} parent=1 // pred_check
      _
    $region31: #{tpu_custom_call.1} parent=1 // pred_check_branch
      %192 = sbr.rel (0) target = $region33
    $region32: #{tpu_custom_call.1} parent=1 // pred_region
      %194 = dma.done [#allocation4], 128
    $region33: #{tpu_custom_call.1} parent=1 // pred_fallthru
      _
    // Predicated region
    $region34: #{tpu_custom_call.1} parent=1 // pred_check
      _
    $region35: #{tpu_custom_call.1} parent=1 // pred_check_branch
      %196 = sbr.rel (0) target = $region37
    $region36: #{tpu_custom_call.1} parent=1 // pred_region
      %198 = dma.done [#allocation9], 128
    $region37: #{tpu_custom_call.1} parent=1 // pred_fallthru
      _
    // Predicated region
    $region38: #{tpu_custom_call.1} parent=1 // pred_check
      _
    $region39: #{tpu_custom_call.1} parent=1 // pred_check_branch
      %200 = sbr.rel (0) target = $region41
    $region40: #{tpu_custom_call.1} parent=1 // pred_region
      %202 = dma.done [#allocation9], 128
    $region41: #{tpu_custom_call.1} parent=1 // pred_fallthru
      _
    %203 = vsyncpa [#allocation3], 1
    %204 = vsyncpa [#allocation6], 1
    %205 = vsyncpa [#allocation4], 1
    %206 = vsyncpa [#allocation9], 1

</llo_original>
